<compile_context>
chip_gen: v7x
topology: tpu7x:2x2x1
jax: 0.10.0
libtpu: 0.0.40
codegen_flags: <defaults>
</compile_context>

<pallas_src>
import jax
import jax.numpy as jnp
from jax.experimental import pallas as pl
from jax.experimental.pallas import tpu as pltpu

HIDDEN = 768                   # bert-base-uncased hidden_size
FC1 = 256
N_GROUPS = 32                  # GroupNorm(32, 256)
GROUP_SIZE = FC1 // N_GROUPS   # 8 channels / group
N_CLASSES = 4
OUT_PAD = 128                  # lane-dense padded output width
EPS = 1e-5                     # torch.nn.GroupNorm default eps


def classifier_head_kernel(x_ref, w1_ref, b1_ref, g_ref, gtg_ref,
                           beta_ref, w2_ref, b2_ref, out_ref):
    # fc1: bf16 operands on the MXU, f32 accumulate. (dropout == identity, eval mode)
    h = jnp.dot(x_ref[...], w1_ref[...],
                preferred_element_type=jnp.float32) + b1_ref[...]       # [TB, 256] f32

    # GroupNorm(32, 256): per-group stats via two small MXU dots (no concatenate, so
    # no [2*TB,256] VMEM copies); 1/GROUP_SIZE is folded into G in the wrapper.
    gmean = jnp.dot(h, g_ref[...], preferred_element_type=jnp.float32)       # [TB, 32]
    gex2 = jnp.dot(h * h, g_ref[...], preferred_element_type=jnp.float32)    # [TB, 32]
    gvar = jnp.maximum(gex2 - gmean * gmean, 0.0)   # one-pass var; clamp rounding < 0
    ginv = jax.lax.rsqrt(gvar + EPS)                # rsqrt on [TB,32] only (EUP)

    # Broadcast per-group scale/offset back to 256 channels (gamma folded into GT_g).
    off_g = -gmean * ginv                                                    # [TB, 32]
    scale_full = jnp.dot(ginv, gtg_ref[...],
                         preferred_element_type=jnp.float32)                 # [TB, 256]
    off_full = jnp.dot(off_g, gtg_ref[...],
                       preferred_element_type=jnp.float32)                   # [TB, 256]

    # Normalize + affine (FMA form) + relu (+ dropout == identity).
    y = h * scale_full + off_full + beta_ref[...]
    r = jnp.maximum(y, 0.0)

    # fc2: bf16 operands, f32 accumulate; 128-lane padded bf16 output (unmasked stores,
    # half the writeback bytes of f32).
    logits = jnp.dot(r.astype(jnp.bfloat16), w2_ref[...],
                     preferred_element_type=jnp.float32) + b2_ref[...]
    out_ref[...] = logits.astype(out_ref.dtype)


def news_classifier_head(pooler_output, params, *, max_tile_b=512):
    B = pooler_output.shape[0]

    # Weights: bf16 for the matmul operands (cast in the wrapper so DMA moves bf16 bytes).
    w1 = params["w1"].astype(jnp.bfloat16)                               # [768, 256]
    b1 = params["b1"].reshape(1, FC1).astype(jnp.float32)
    beta = params["beta"].reshape(1, FC1).astype(jnp.float32)
    gamma = params["gamma"].astype(jnp.float32)                          # [256]
    # fc2 zero-padded to 128 output lanes (sliced back to N_CLASSES outside).
    w2 = jnp.zeros((FC1, OUT_PAD), jnp.bfloat16).at[:, :N_CLASSES].set(
        params["w2"].astype(jnp.bfloat16))
    b2 = jnp.zeros((1, OUT_PAD), jnp.float32).at[:, :N_CLASSES].set(
        params["b2"].astype(jnp.float32))

    # Group-membership matrices (f32 so GroupNorm stats stay f32).
    chan = jnp.arange(FC1)
    member = (chan[:, None] // GROUP_SIZE
              == jnp.arange(N_GROUPS)[None, :]).astype(jnp.float32)      # [256, 32]
    G_scaled = member / GROUP_SIZE            # h @ G_scaled == per-group mean
    GT_gamma = member.T * gamma[None, :]      # [32, 256]; gamma folded into broadcast

    # Batch tiling: bf16 wants sublane multiples of 16; aim for >= 2 grid steps so
    # both v7x TensorCores get work (harmless on single-TC v5e/v6e).
    tile_b = min(max_tile_b, max(16, pl.cdiv(pl.cdiv(B, 2), 16) * 16))
    padded_b = pl.cdiv(B, tile_b) * tile_b
    x = pooler_output.astype(jnp.bfloat16)
    if padded_b != B:
        x = jnp.pad(x, ((0, padded_b - B), (0, 0)))
    grid = (padded_b // tile_b,)

    # v5e's default scoped VMEM is 16 MiB; only lift it for big tiles, never to the
    # physical limit (v7x has 64 MiB total per TC).
    vmem_limit = (48 * 1024 * 1024) if tile_b >= 512 else None

    # Advisory cost so XLA schedules this small head well against the BERT encoder.
    flops = 2 * padded_b * (HIDDEN * FC1 + FC1 * OUT_PAD
                            + 2 * FC1 * N_GROUPS + 2 * N_GROUPS * FC1)
    bytes_accessed = (padded_b * (HIDDEN + OUT_PAD) * 2                  # bf16 x + out
                      + (HIDDEN * FC1 + FC1 * OUT_PAD) * 2               # bf16 weights
                      + (4 * FC1 + 2 * FC1 * N_GROUPS) * 4)              # f32 small tensors
    cost = pl.CostEstimate(flops=flops,
                           transcendentals=padded_b * N_GROUPS,
                           bytes_accessed=bytes_accessed)

    def const(shape):
        return pl.BlockSpec(shape, lambda i: (0,) * len(shape))

    out_pad = pl.pallas_call(
        classifier_head_kernel,
        out_shape=jax.ShapeDtypeStruct((padded_b, OUT_PAD), jnp.bfloat16),
        grid=grid,
        in_specs=[
            pl.BlockSpec((tile_b, HIDDEN), lambda i: (i, 0)),   # x, batch-tiled
            const((HIDDEN, FC1)),                               # w1 (VMEM-resident)
            const((1, FC1)),                                    # b1
            const((FC1, N_GROUPS)),                             # G / 8
            const((N_GROUPS, FC1)),                             # gamma-folded G^T
            const((1, FC1)),                                    # beta
            const((FC1, OUT_PAD)),                              # w2 (lane-padded)
            const((1, OUT_PAD)),                                # b2 (lane-padded)
        ],
        out_specs=pl.BlockSpec((tile_b, OUT_PAD), lambda i: (i, 0)),
        compiler_params=pltpu.CompilerParams(
            dimension_semantics=("parallel",),
            vmem_limit_bytes=vmem_limit),
        cost_estimate=cost,
    )(x, w1, b1, G_scaled, GT_gamma, beta, w2, b2)

    # Slice padding away and restore the f32 public dtype.
    return out_pad[:B, :N_CLASSES].astype(jnp.float32)


def init_params(key):
    ks = jax.random.split(key, 2)

    def lin(k, fan_in, fan_out):
        bound = 1.0 / jnp.sqrt(fan_in)
        kw, kb = jax.random.split(k)
        w = jax.random.uniform(kw, (fan_in, fan_out), jnp.float32, -bound, bound)
        b = jax.random.uniform(kb, (fan_out,), jnp.float32, -bound, bound)
        return w, b

    w1, b1 = lin(ks[0], HIDDEN, FC1)
    w2, b2 = lin(ks[1], FC1, N_CLASSES)
    gamma = jnp.ones((FC1,), jnp.float32)    # GroupNorm affine init
    beta = jnp.zeros((FC1,), jnp.float32)
    return {"w1": w1, "b1": b1, "gamma": gamma, "beta": beta, "w2": w2, "b2": b2}


def reference_head(pooler_output, params):
    # Pure-JAX f32 reference (matches the PyTorch eval-mode forward).
    h = pooler_output @ params["w1"] + params["b1"]
    hg = h.reshape(h.shape[0], N_GROUPS, GROUP_SIZE)
    mean = hg.mean(-1, keepdims=True)
    var = ((hg - mean) ** 2).mean(-1, keepdims=True)
    xn = ((hg - mean) / jnp.sqrt(var + EPS)).reshape(h.shape[0], FC1)
    y = xn * params["gamma"] + params["beta"]
    r = jnp.maximum(y, 0.0)
    return r @ params["w2"] + params["b2"]


if __name__ == "__main__":
    key = jax.random.PRNGKey(0)
    k_in, k_par = jax.random.split(key)

    B = 2
    # Synthetic BERT pooler_output (tanh-squashed like the real pooler).
    pooler_output = jnp.tanh(jax.random.normal(k_in, (B, HIDDEN), jnp.float32))
    params = init_params(k_par)

    logits = news_classifier_head(pooler_output, params)
    logits = jax.block_until_ready(logits)

    ref = reference_head(pooler_output, params)
    assert logits.shape == (B, N_CLASSES)
    assert logits.dtype == jnp.float32
    # bf16 matmul operands + bf16 padded output -> looser tolerance than pure f32.
    assert jnp.allclose(logits, ref, atol=3e-2, rtol=3e-2)

    print("KERNEL_OK")
</pallas_src>

<mosaic_0001>
module attributes {stable_mosaic.version = 11 : i64} {
  func.func @classifier_head_kernel(%arg0: i32, %arg1: memref<16x768xbf16, #tpu.memory_space<vmem>>, %arg2: memref<768x256xbf16, #tpu.memory_space<vmem>>, %arg3: memref<1x256xf32, #tpu.memory_space<vmem>>, %arg4: memref<256x32xf32, #tpu.memory_space<vmem>>, %arg5: memref<32x256xf32, #tpu.memory_space<vmem>>, %arg6: memref<1x256xf32, #tpu.memory_space<vmem>>, %arg7: memref<256x128xbf16, #tpu.memory_space<vmem>>, %arg8: memref<1x128xf32, #tpu.memory_space<vmem>>, %arg9: memref<16x128xbf16, #tpu.memory_space<vmem>>) attributes {dimension_semantics = [#tpu.dimension_semantics<parallel>], iteration_bounds = array<i64: 1>, scalar_prefetch = 0 : i64, scratch_operands = 0 : i64, tpu.core_type = #tpu.core_type<tc>, window_params = [{transform_indices = @transform_0, window_bounds = array<i64: 16, 768>}, {pipeline_mode = #tpu.pipeline_mode<synchronous>, transform_indices = @transform_1, window_bounds = array<i64: 768, 256>}, {pipeline_mode = #tpu.pipeline_mode<synchronous>, transform_indices = @transform_2, window_bounds = array<i64: 1, 256>}, {pipeline_mode = #tpu.pipeline_mode<synchronous>, transform_indices = @transform_3, window_bounds = array<i64: 256, 32>}, {pipeline_mode = #tpu.pipeline_mode<synchronous>, transform_indices = @transform_4, window_bounds = array<i64: 32, 256>}, {pipeline_mode = #tpu.pipeline_mode<synchronous>, transform_indices = @transform_5, window_bounds = array<i64: 1, 256>}, {pipeline_mode = #tpu.pipeline_mode<synchronous>, transform_indices = @transform_6, window_bounds = array<i64: 256, 128>}, {pipeline_mode = #tpu.pipeline_mode<synchronous>, transform_indices = @transform_7, window_bounds = array<i64: 1, 128>}, {transform_indices = @transform_8, window_bounds = array<i64: 16, 128>}]} {
    %c0 = arith.constant 0 : index
    %c0_0 = arith.constant 0 : index
    %0 = vector.load %arg1[%c0, %c0_0] : memref<16x768xbf16, #tpu.memory_space<vmem>>, vector<16x768xbf16>
    %c0_1 = arith.constant 0 : index
    %c0_2 = arith.constant 0 : index
    %1 = vector.load %arg2[%c0_1, %c0_2] : memref<768x256xbf16, #tpu.memory_space<vmem>>, vector<768x256xbf16>
    %cst = arith.constant dense<0.000000e+00> : vector<16x256xf32>
    %2 = tpu.matmul %0, %1, %cst {dimension_numbers = #tpu.dot_dimension_numbers<[1], [0], [0], [1], [0, 0, 1, 1], [], []>} : vector<16x768xbf16>, vector<768x256xbf16>, vector<16x256xf32> -> vector<16x256xf32>
    %c0_3 = arith.constant 0 : index
    %c0_4 = arith.constant 0 : index
    %3 = vector.load %arg3[%c0_3, %c0_4] : memref<1x256xf32, #tpu.memory_space<vmem>>, vector<1x256xf32>
    %4 = vector.broadcast %3 : vector<1x256xf32> to vector<16x256xf32>
    %5 = arith.addf %2, %4 : vector<16x256xf32>
    %c0_5 = arith.constant 0 : index
    %c0_6 = arith.constant 0 : index
    %6 = vector.load %arg4[%c0_5, %c0_6] : memref<256x32xf32, #tpu.memory_space<vmem>>, vector<256x32xf32>
    %cst_7 = arith.constant dense<0.000000e+00> : vector<16x32xf32>
    %7 = tpu.matmul %5, %6, %cst_7 {dimension_numbers = #tpu.dot_dimension_numbers<[1], [0], [0], [1], [0, 0, 1, 1], [], []>} : vector<16x256xf32>, vector<256x32xf32>, vector<16x32xf32> -> vector<16x32xf32>
    %8 = arith.mulf %5, %5 : vector<16x256xf32>
    %c0_8 = arith.constant 0 : index
    %c0_9 = arith.constant 0 : index
    %9 = vector.load %arg4[%c0_8, %c0_9] : memref<256x32xf32, #tpu.memory_space<vmem>>, vector<256x32xf32>
    %cst_10 = arith.constant dense<0.000000e+00> : vector<16x32xf32>
    %10 = tpu.matmul %8, %9, %cst_10 {dimension_numbers = #tpu.dot_dimension_numbers<[1], [0], [0], [1], [0, 0, 1, 1], [], []>} : vector<16x256xf32>, vector<256x32xf32>, vector<16x32xf32> -> vector<16x32xf32>
    %11 = arith.mulf %7, %7 : vector<16x32xf32>
    %12 = arith.subf %10, %11 : vector<16x32xf32>
    %cst_11 = arith.constant 0.000000e+00 : f32
    %13 = vector.broadcast %cst_11 : f32 to vector<16x32xf32>
    %14 = arith.maximumf %12, %13 : vector<16x32xf32>
    %cst_12 = arith.constant 9.99999974E-6 : f32
    %15 = vector.broadcast %cst_12 : f32 to vector<16x32xf32>
    %16 = arith.addf %14, %15 : vector<16x32xf32>
    %17 = math.rsqrt %16 : vector<16x32xf32>
    %cst_13 = arith.constant 0.000000e+00 : f32
    %18 = vector.broadcast %cst_13 : f32 to vector<16x32xf32>
    %19 = arith.subf %18, %7 : vector<16x32xf32>
    %20 = arith.mulf %19, %17 : vector<16x32xf32>
    %c0_14 = arith.constant 0 : index
    %c0_15 = arith.constant 0 : index
    %21 = vector.load %arg5[%c0_14, %c0_15] : memref<32x256xf32, #tpu.memory_space<vmem>>, vector<32x256xf32>
    %cst_16 = arith.constant dense<0.000000e+00> : vector<16x256xf32>
    %22 = tpu.matmul %17, %21, %cst_16 {dimension_numbers = #tpu.dot_dimension_numbers<[1], [0], [0], [1], [0, 0, 1, 1], [], []>} : vector<16x32xf32>, vector<32x256xf32>, vector<16x256xf32> -> vector<16x256xf32>
    %c0_17 = arith.constant 0 : index
    %c0_18 = arith.constant 0 : index
    %23 = vector.load %arg5[%c0_17, %c0_18] : memref<32x256xf32, #tpu.memory_space<vmem>>, vector<32x256xf32>
    %cst_19 = arith.constant dense<0.000000e+00> : vector<16x256xf32>
    %24 = tpu.matmul %20, %23, %cst_19 {dimension_numbers = #tpu.dot_dimension_numbers<[1], [0], [0], [1], [0, 0, 1, 1], [], []>} : vector<16x32xf32>, vector<32x256xf32>, vector<16x256xf32> -> vector<16x256xf32>
    %25 = arith.mulf %5, %22 : vector<16x256xf32>
    %26 = arith.addf %25, %24 : vector<16x256xf32>
    %c0_20 = arith.constant 0 : index
    %c0_21 = arith.constant 0 : index
    %27 = vector.load %arg6[%c0_20, %c0_21] : memref<1x256xf32, #tpu.memory_space<vmem>>, vector<1x256xf32>
    %28 = vector.broadcast %27 : vector<1x256xf32> to vector<16x256xf32>
    %29 = arith.addf %26, %28 : vector<16x256xf32>
    %cst_22 = arith.constant 0.000000e+00 : f32
    %30 = vector.broadcast %cst_22 : f32 to vector<16x256xf32>
    %31 = arith.maximumf %29, %30 : vector<16x256xf32>
    %32 = arith.truncf %31 : vector<16x256xf32> to vector<16x256xbf16>
    %c0_23 = arith.constant 0 : index
    %c0_24 = arith.constant 0 : index
    %33 = vector.load %arg7[%c0_23, %c0_24] : memref<256x128xbf16, #tpu.memory_space<vmem>>, vector<256x128xbf16>
    %cst_25 = arith.constant dense<0.000000e+00> : vector<16x128xf32>
    %34 = tpu.matmul %32, %33, %cst_25 {dimension_numbers = #tpu.dot_dimension_numbers<[1], [0], [0], [1], [0, 0, 1, 1], [], []>} : vector<16x256xbf16>, vector<256x128xbf16>, vector<16x128xf32> -> vector<16x128xf32>
    %c0_26 = arith.constant 0 : index
    %c0_27 = arith.constant 0 : index
    %35 = vector.load %arg8[%c0_26, %c0_27] : memref<1x128xf32, #tpu.memory_space<vmem>>, vector<1x128xf32>
    %36 = vector.broadcast %35 : vector<1x128xf32> to vector<16x128xf32>
    %37 = arith.addf %34, %36 : vector<16x128xf32>
    %38 = arith.truncf %37 : vector<16x128xf32> to vector<16x128xbf16>
    %c0_28 = arith.constant 0 : index
    %c0_29 = arith.constant 0 : index
    %39 = vector.load %arg9[%c0_28, %c0_29] : memref<16x128xbf16, #tpu.memory_space<vmem>>, vector<16x128xbf16>
    tpu.vector_store %arg9[%c0_28, %c0_29], %38 {strides = array<i32>} : memref<16x128xbf16, #tpu.memory_space<vmem>>, vector<16x128xbf16>,
    return
  }
  func.func @transform_0(%arg0: i32) -> (i32, i32) {
    %c0_i32 = arith.constant 0 : i32
    %c0_i32_0 = arith.constant 0 : i32
    return %arg0, %c0_i32 : i32, i32
  }
  func.func @transform_1(%arg0: i32) -> (i32, i32) {
    %c0_i32 = arith.constant 0 : i32
    %c0_i32_0 = arith.constant 0 : i32
    %c0_i32_1 = arith.constant 0 : i32
    return %c0_i32, %c0_i32_0 : i32, i32
  }
  func.func @transform_2(%arg0: i32) -> (i32, i32) {
    %c0_i32 = arith.constant 0 : i32
    %c0_i32_0 = arith.constant 0 : i32
    %c0_i32_1 = arith.constant 0 : i32
    return %c0_i32, %c0_i32_0 : i32, i32
  }
  func.func @transform_3(%arg0: i32) -> (i32, i32) {
    %c0_i32 = arith.constant 0 : i32
    %c0_i32_0 = arith.constant 0 : i32
    %c0_i32_1 = arith.constant 0 : i32
    return %c0_i32, %c0_i32_0 : i32, i32
  }
  func.func @transform_4(%arg0: i32) -> (i32, i32) {
    %c0_i32 = arith.constant 0 : i32
    %c0_i32_0 = arith.constant 0 : i32
    %c0_i32_1 = arith.constant 0 : i32
    return %c0_i32, %c0_i32_0 : i32, i32
  }
  func.func @transform_5(%arg0: i32) -> (i32, i32) {
    %c0_i32 = arith.constant 0 : i32
    %c0_i32_0 = arith.constant 0 : i32
    %c0_i32_1 = arith.constant 0 : i32
    return %c0_i32, %c0_i32_0 : i32, i32
  }
  func.func @transform_6(%arg0: i32) -> (i32, i32) {
    %c0_i32 = arith.constant 0 : i32
    %c0_i32_0 = arith.constant 0 : i32
    %c0_i32_1 = arith.constant 0 : i32
    return %c0_i32, %c0_i32_0 : i32, i32
  }
  func.func @transform_7(%arg0: i32) -> (i32, i32) {
    %c0_i32 = arith.constant 0 : i32
    %c0_i32_0 = arith.constant 0 : i32
    %c0_i32_1 = arith.constant 0 : i32
    return %c0_i32, %c0_i32_0 : i32, i32
  }
  func.func @transform_8(%arg0: i32) -> (i32, i32) {
    %c0_i32 = arith.constant 0 : i32
    %c0_i32_0 = arith.constant 0 : i32
    return %arg0, %c0_i32 : i32, i32
  }
}

</mosaic_0001>

<llo_original>
// kernel: tpu_custom_call.1
$region0: #{tpu_custom_call.1}
  #allocation0 [shape = 'u32[]', space=smem, size = 0x4, offset = 0x4, fixed_abs, tag = 'smem constant byte address 0x4 - core index']
  #allocation1 [shape = 'u32[144,128]{1,0:T(1,128)}', space=vmem, size = 0x12000, scoped, tag = 'internal scratch']
  %s0 = inlined_call_operand.vmem [shape: bf16[16,768], index: 0, kind: input, shape index: {}]
  %s1 = inlined_call_operand.hbm [shape: bf16[768,256], index: 1, kind: input, shape index: {}]
  %s2 = inlined_call_operand.vmem [shape: f32[1,256], index: 2, kind: input, shape index: {}]
  %s3 = inlined_call_operand.vmem [shape: f32[256,32], index: 3, kind: input, shape index: {}]
  %s4 = inlined_call_operand.vmem [shape: f32[32,256], index: 4, kind: input, shape index: {}]
  %s5 = inlined_call_operand.vmem [shape: f32[1,256], index: 5, kind: input, shape index: {}]
  %s6 = inlined_call_operand.vmem [shape: bf16[256,128], index: 6, kind: input, shape index: {}]
  %s7 = inlined_call_operand.vmem [shape: f32[1,128], index: 7, kind: input, shape index: {}]
  %s8 = inlined_call_operand.hbm [shape: bf16[16,128], index: 8, kind: output, shape index: {}]
  %s9 = sld [smem:[#allocation0]]
  $region46: #{tpu_custom_call.1} parent=0
    _
  %s11 = ssub.s32 1, %s9
  %s12 = scalar_select 0, %s11, %s9
  $region1: #{tpu_custom_call.1} parent=0
    #allocation2 [shape = 'u8[393216]{0}', space=vmem, size = 0x60000, scoped, tag = 'input window, operand 1, single buffered']
    #allocation3 [shape = 's32[1]{0}', space=sflag, size = 0x4, scoped, tag = 'scoped memory for tpu_custom_call.1']
    #allocation4 [shape = 's32[1]{0}', space=sflag, size = 0x4, scoped, tag = 'scoped memory for tpu_custom_call.1']
    #allocation5 [shape = 'u8[4096]{0}', space=vmem, size = 0x1000, scoped, tag = 'output window, operand 0, single buffered']
    %13 = vsyncpa [#allocation3], 0
    %14 = vsyncpa [#allocation4], 0
    // Predicated region
    $region2: #{tpu_custom_call.1} parent=1 // pred_check
      _
    $region3: #{tpu_custom_call.1} parent=1 // pred_check_branch
      %16 = sbr.rel (0) target = $region5
    $region4: #{tpu_custom_call.1} parent=1 // pred_region
      _
    $region5: #{tpu_custom_call.1} parent=1 // pred_fallthru
      _
    // Predicated region
    $region6: #{tpu_custom_call.1} parent=1 // pred_check
      _
    $region7: #{tpu_custom_call.1} parent=1 // pred_check_branch
      %18 = sbr.rel (0) target = $region9
    $region8: #{tpu_custom_call.1} parent=1 // pred_region
      %s20 = ssub.s32 12288, 12288
      %21 = vsyncadd [#allocation3], %s20
      %s22 = sshll.u32 [#allocation2], 4
      %s23 = int_to_ptr.vmem [resolvable:$true] %s22
      %28 = dma.hbm_to_vmem [thread:$0]  %s1, 12288, %s23, [#allocation3], 128, 128, 8
    $region9: #{tpu_custom_call.1} parent=1 // pred_fallthru
      _
    // Predicated region
    $region10: #{tpu_custom_call.1} parent=1 // pred_check
      _
    $region11: #{tpu_custom_call.1} parent=1 // pred_check_branch
      %30 = sbr.rel (0) target = $region13
    $region12: #{tpu_custom_call.1} parent=1 // pred_region
      _
    $region13: #{tpu_custom_call.1} parent=1 // pred_fallthru
      _
    // Predicated region
    $region14: #{tpu_custom_call.1} parent=1 // pred_check
      _
    $region15: #{tpu_custom_call.1} parent=1 // pred_check_branch
      %32 = sbr.rel (0) target = $region17
    $region16: #{tpu_custom_call.1} parent=1 // pred_region
      _
    $region17: #{tpu_custom_call.1} parent=1 // pred_fallthru
      _
    // Predicated region
    $region18: #{tpu_custom_call.1} parent=1 // pred_check
      _
    $region19: #{tpu_custom_call.1} parent=1 // pred_check_branch
      %34 = sbr.rel (0) target = $region21
    $region20: #{tpu_custom_call.1} parent=1 // pred_region
      _
    $region21: #{tpu_custom_call.1} parent=1 // pred_fallthru
      _
    // Predicated region
    $region22: #{tpu_custom_call.1} parent=1 // pred_check
      _
    $region23: #{tpu_custom_call.1} parent=1 // pred_check_branch
      %36 = sbr.rel (0) target = $region25
    $region24: #{tpu_custom_call.1} parent=1 // pred_region
      _
    $region25: #{tpu_custom_call.1} parent=1 // pred_fallthru
      _
    // Predicated region
    $region26: #{tpu_custom_call.1} parent=1 // pred_check
      _
    $region27: #{tpu_custom_call.1} parent=1 // pred_check_branch
      %38 = sbr.rel (0) target = $region29
    $region28: #{tpu_custom_call.1} parent=1 // pred_region
      _
    $region29: #{tpu_custom_call.1} parent=1 // pred_fallthru
      _
    // Predicated region
    $region30: #{tpu_custom_call.1} parent=1 // pred_check
      _
    $region31: #{tpu_custom_call.1} parent=1 // pred_check_branch
      %40 = sbr.rel (0) target = $region33
    $region32: #{tpu_custom_call.1} parent=1 // pred_region
      _
    $region33: #{tpu_custom_call.1} parent=1 // pred_fallthru
      _
    // Predicated region
    $region34: #{tpu_custom_call.1} parent=1 // pred_check
      _
    $region35: #{tpu_custom_call.1} parent=1 // pred_check_branch
      %42 = sbr.rel (0) target = $region37
    $region36: #{tpu_custom_call.1} parent=1 // pred_region
      %43 = dma.done [#allocation3], 12288
    $region37: #{tpu_custom_call.1} parent=1 // pred_fallthru
      _
    %v45 = vld [vmem:[%s0] sm:$0xff]
    %v46 = vld [vmem:[%s0 + $0x8] sm:$0xff]
    %v47 = vld [vmem:[%s0 + $0x10] sm:$0xff]
    %v48 = vld [vmem:[%s0 + $0x18] sm:$0xff]
    %v49 = vld [vmem:[%s0 + $0x20] sm:$0xff]
    %v50 = vld [vmem:[%s0 + $0x28] sm:$0xff]
    %v51 = vld [vmem:[#allocation2] sm:$0xff]
    %v52 = vld [vmem:[#allocation2 + $0x8] sm:$0xff]
    %v53 = vld [vmem:[#allocation2 + $0x10] sm:$0xff]
    %v54 = vld [vmem:[#allocation2 + $0x18] sm:$0xff]
    %v55 = vld [vmem:[#allocation2 + $0x20] sm:$0xff]
    %v56 = vld [vmem:[#allocation2 + $0x28] sm:$0xff]
    %v57 = vld [vmem:[#allocation2 + $0x30] sm:$0xff]
    %v58 = vld [vmem:[#allocation2 + $0x38] sm:$0xff]
    %v59 = vld [vmem:[#allocation2 + $0x40] sm:$0xff]
    %v60 = vld [vmem:[#allocation2 + $0x48] sm:$0xff]
    %v61 = vld [vmem:[#allocation2 + $0x50] sm:$0xff]
    %v62 = vld [vmem:[#allocation2 + $0x58] sm:$0xff]
    %v63 = vld [vmem:[#allocation2 + $0x60] sm:$0xff]
    %v64 = vld [vmem:[#allocation2 + $0x68] sm:$0xff]
    %v65 = vld [vmem:[#allocation2 + $0x70] sm:$0xff]
    %v66 = vld [vmem:[#allocation2 + $0x78] sm:$0xff]
    %v67 = vld [vmem:[#allocation2 + $0x80] sm:$0xff]
    %v68 = vld [vmem:[#allocation2 + $0x88] sm:$0xff]
    %v69 = vld [vmem:[#allocation2 + $0x90] sm:$0xff]
    %v70 = vld [vmem:[#allocation2 + $0x98] sm:$0xff]
    %v71 = vld [vmem:[#allocation2 + $0xa0] sm:$0xff]
    %v72 = vld [vmem:[#allocation2 + $0xa8] sm:$0xff]
    %v73 = vld [vmem:[#allocation2 + $0xb0] sm:$0xff]
    %v74 = vld [vmem:[#allocation2 + $0xb8] sm:$0xff]
    %v75 = vld [vmem:[#allocation2 + $0xc0] sm:$0xff]
    %v76 = vld [vmem:[#allocation2 + $0xc8] sm:$0xff]
    %v77 = vld [vmem:[#allocation2 + $0xd0] sm:$0xff]
    %v78 = vld [vmem:[#allocation2 + $0xd8] sm:$0xff]
    %v79 = vld [vmem:[#allocation2 + $0xe0] sm:$0xff]
    %v80 = vld [vmem:[#allocation2 + $0xe8] sm:$0xff]
    %v81 = vld [vmem:[#allocation2 + $0xf0] sm:$0xff]
    %v82 = vld [vmem:[#allocation2 + $0xf8] sm:$0xff]
    %v83 = vld [vmem:[#allocation2 + $0x100] sm:$0xff]
    %v84 = vld [vmem:[#allocation2 + $0x108] sm:$0xff]
    %v85 = vld [vmem:[#allocation2 + $0x110] sm:$0xff]
    %v86 = vld [vmem:[#allocation2 + $0x118] sm:$0xff]
    %v87 = vld [vmem:[#allocation2 + $0x120] sm:$0xff]
    %v88 = vld [vmem:[#allocation2 + $0x128] sm:$0xff]
    %v89 = vld [vmem:[#allocation2 + $0x130] sm:$0xff]
    %v90 = vld [vmem:[#allocation2 + $0x138] sm:$0xff]
    %v91 = vld [vmem:[#allocation2 + $0x140] sm:$0xff]
    %v92 = vld [vmem:[#allocation2 + $0x148] sm:$0xff]
    %v93 = vld [vmem:[#allocation2 + $0x150] sm:$0xff]
    %v94 = vld [vmem:[#allocation2 + $0x158] sm:$0xff]
    %v95 = vld [vmem:[#allocation2 + $0x160] sm:$0xff]
    %v96 = vld [vmem:[#allocation2 + $0x168] sm:$0xff]
    %v97 = vld [vmem:[#allocation2 + $0x170] sm:$0xff]
    %v98 = vld [vmem:[#allocation2 + $0x178] sm:$0xff]
    %v99 = vld [vmem:[#allocation2 + $0x180] sm:$0xff]
    %v100 = vld [vmem:[#allocation2 + $0x188] sm:$0xff]
    %v101 = vld [vmem:[#allocation2 + $0x190] sm:$0xff]
    %v102 = vld [vmem:[#allocation2 + $0x198] sm:$0xff]
    %v103 = vld [vmem:[#allocation2 + $0x1a0] sm:$0xff]
    %v104 = vld [vmem:[#allocation2 + $0x1a8] sm:$0xff]
    %v105 = vld [vmem:[#allocation2 + $0x1b0] sm:$0xff]
    %v106 = vld [vmem:[#allocation2 + $0x1b8] sm:$0xff]
    %v107 = vld [vmem:[#allocation2 + $0x1c0] sm:$0xff]
    %v108 = vld [vmem:[#allocation2 + $0x1c8] sm:$0xff]
    %v109 = vld [vmem:[#allocation2 + $0x1d0] sm:$0xff]
    %v110 = vld [vmem:[#allocation2 + $0x1d8] sm:$0xff]
    %v111 = vld [vmem:[#allocation2 + $0x1e0] sm:$0xff]
    %v112 = vld [vmem:[#allocation2 + $0x1e8] sm:$0xff]
    %v113 = vld [vmem:[#allocation2 + $0x1f0] sm:$0xff]
    %v114 = vld [vmem:[#allocation2 + $0x1f8] sm:$0xff]
    %v115 = vld [vmem:[#allocation2 + $0x200] sm:$0xff]
    %v116 = vld [vmem:[#allocation2 + $0x208] sm:$0xff]
    %v117 = vld [vmem:[#allocation2 + $0x210] sm:$0xff]
    %v118 = vld [vmem:[#allocation2 + $0x218] sm:$0xff]
    %v119 = vld [vmem:[#allocation2 + $0x220] sm:$0xff]
    %v120 = vld [vmem:[#allocation2 + $0x228] sm:$0xff]
    %v121 = vld [vmem:[#allocation2 + $0x230] sm:$0xff]
    %v122 = vld [vmem:[#allocation2 + $0x238] sm:$0xff]
    %v123 = vld [vmem:[#allocation2 + $0x240] sm:$0xff]
    %v124 = vld [vmem:[#allocation2 + $0x248] sm:$0xff]
    %v125 = vld [vmem:[#allocation2 + $0x250] sm:$0xff]
    %v126 = vld [vmem:[#allocation2 + $0x258] sm:$0xff]
    %v127 = vld [vmem:[#allocation2 + $0x260] sm:$0xff]
    %v128 = vld [vmem:[#allocation2 + $0x268] sm:$0xff]
    %v129 = vld [vmem:[#allocation2 + $0x270] sm:$0xff]
    %v130 = vld [vmem:[#allocation2 + $0x278] sm:$0xff]
    %v131 = vld [vmem:[#allocation2 + $0x280] sm:$0xff]
    %v132 = vld [vmem:[#allocation2 + $0x288] sm:$0xff]
    %v133 = vld [vmem:[#allocation2 + $0x290] sm:$0xff]
    %v134 = vld [vmem:[#allocation2 + $0x298] sm:$0xff]
    %v135 = vld [vmem:[#allocation2 + $0x2a0] sm:$0xff]
    %v136 = vld [vmem:[#allocation2 + $0x2a8] sm:$0xff]
    %v137 = vld [vmem:[#allocation2 + $0x2b0] sm:$0xff]
    %v138 = vld [vmem:[#allocation2 + $0x2b8] sm:$0xff]
    %v139 = vld [vmem:[#allocation2 + $0x2c0] sm:$0xff]
    %v140 = vld [vmem:[#allocation2 + $0x2c8] sm:$0xff]
    %v141 = vld [vmem:[#allocation2 + $0x2d0] sm:$0xff]
    %v142 = vld [vmem:[#allocation2 + $0x2d8] sm:$0xff]
    %v143 = vld [vmem:[#allocation2 + $0x2e0] sm:$0xff]
    %v144 = vld [vmem:[#allocation2 + $0x2e8] sm:$0xff]
    %v145 = vld [vmem:[#allocation2 + $0x2f0] sm:$0xff]
    %v146 = vld [vmem:[#allocation2 + $0x2f8] sm:$0xff]
    %v147 = vld [vmem:[%s2] sm:$0x3]
    %v149 = vlaneseq
    %v150 = vshrl.u32 %v149, 7
    %v151 = vsub.s32 0, %v150
    %v152 = vrot.slane %v147, %v151
    %v153 = vlaneseq
    %v154 = vshrl.u32 %v153, 7
    %v155 = vsub.s32 1, %v154
    %v156 = vrot.slane %v147, %v155
    %v165 = vunpack.c.l.b16 %v45
    %v166 = vunpack.c.h.b16 %v45
    %v167 = vunpack.c.l.b16 %v46
    %v168 = vunpack.c.h.b16 %v46
    %v169 = vunpack.c.l.b16 %v47
    %v170 = vunpack.c.h.b16 %v47
    %v171 = vunpack.c.l.b16 %v48
    %v172 = vunpack.c.h.b16 %v48
    %v173 = vunpack.c.l.b16 %v49
    %v174 = vunpack.c.h.b16 %v49
    %v175 = vunpack.c.l.b16 %v50
    %v176 = vunpack.c.h.b16 %v50
    %v177 = vpack.c.b16 %v171, %v165
    %v178 = vpack.c.b16 %v172, %v166
    %v179 = vpack.c.b16 %v173, %v167
    %v180 = vpack.c.b16 %v174, %v168
    %v181 = vpack.c.b16 %v175, %v169
    %v182 = vpack.c.b16 %v176, %v170
    %v285 = vunpack.c.l.b16 %v51
    %v286 = vunpack.c.h.b16 %v51
    %v287 = vunpack.c.l.b16 %v52
    %v288 = vunpack.c.h.b16 %v52
    %v289 = vunpack.c.l.b16 %v53
    %v290 = vunpack.c.h.b16 %v53
    %v291 = vunpack.c.l.b16 %v54
    %v292 = vunpack.c.h.b16 %v54
    %v293 = vunpack.c.l.b16 %v55
    %v294 = vunpack.c.h.b16 %v55
    %v295 = vunpack.c.l.b16 %v56
    %v296 = vunpack.c.h.b16 %v56
    %v297 = vunpack.c.l.b16 %v57
    %v298 = vunpack.c.h.b16 %v57
    %v299 = vunpack.c.l.b16 %v58
    %v300 = vunpack.c.h.b16 %v58
    %v301 = vunpack.c.l.b16 %v59
    %v302 = vunpack.c.h.b16 %v59
    %v303 = vunpack.c.l.b16 %v60
    %v304 = vunpack.c.h.b16 %v60
    %v305 = vunpack.c.l.b16 %v61
    %v306 = vunpack.c.h.b16 %v61
    %v307 = vunpack.c.l.b16 %v62
    %v308 = vunpack.c.h.b16 %v62
    %v309 = vunpack.c.l.b16 %v63
    %v310 = vunpack.c.h.b16 %v63
    %v311 = vunpack.c.l.b16 %v64
    %v312 = vunpack.c.h.b16 %v64
    %v313 = vunpack.c.l.b16 %v65
    %v314 = vunpack.c.h.b16 %v65
    %v315 = vunpack.c.l.b16 %v66
    %v316 = vunpack.c.h.b16 %v66
    %v317 = vunpack.c.l.b16 %v67
    %v318 = vunpack.c.h.b16 %v67
    %v319 = vunpack.c.l.b16 %v68
    %v320 = vunpack.c.h.b16 %v68
    %v321 = vunpack.c.l.b16 %v69
    %v322 = vunpack.c.h.b16 %v69
    %v323 = vunpack.c.l.b16 %v70
    %v324 = vunpack.c.h.b16 %v70
    %v325 = vunpack.c.l.b16 %v71
    %v326 = vunpack.c.h.b16 %v71
    %v327 = vunpack.c.l.b16 %v72
    %v328 = vunpack.c.h.b16 %v72
    %v329 = vunpack.c.l.b16 %v73
    %v330 = vunpack.c.h.b16 %v73
    %v331 = vunpack.c.l.b16 %v74
    %v332 = vunpack.c.h.b16 %v74
    %v333 = vunpack.c.l.b16 %v75
    %v334 = vunpack.c.h.b16 %v75
    %v335 = vunpack.c.l.b16 %v76
    %v336 = vunpack.c.h.b16 %v76
    %v337 = vunpack.c.l.b16 %v77
    %v338 = vunpack.c.h.b16 %v77
    %v339 = vunpack.c.l.b16 %v78
    %v340 = vunpack.c.h.b16 %v78
    %v341 = vunpack.c.l.b16 %v79
    %v342 = vunpack.c.h.b16 %v79
    %v343 = vunpack.c.l.b16 %v80
    %v344 = vunpack.c.h.b16 %v80
    %v345 = vunpack.c.l.b16 %v81
    %v346 = vunpack.c.h.b16 %v81
    %v347 = vunpack.c.l.b16 %v82
    %v348 = vunpack.c.h.b16 %v82
    %v349 = vunpack.c.l.b16 %v83
    %v350 = vunpack.c.h.b16 %v83
    %v351 = vunpack.c.l.b16 %v84
    %v352 = vunpack.c.h.b16 %v84
    %v353 = vunpack.c.l.b16 %v85
    %v354 = vunpack.c.h.b16 %v85
    %v355 = vunpack.c.l.b16 %v86
    %v356 = vunpack.c.h.b16 %v86
    %v357 = vunpack.c.l.b16 %v87
    %v358 = vunpack.c.h.b16 %v87
    %v359 = vunpack.c.l.b16 %v88
    %v360 = vunpack.c.h.b16 %v88
    %v361 = vunpack.c.l.b16 %v89
    %v362 = vunpack.c.h.b16 %v89
    %v363 = vunpack.c.l.b16 %v90
    %v364 = vunpack.c.h.b16 %v90
    %v365 = vunpack.c.l.b16 %v91
    %v366 = vunpack.c.h.b16 %v91
    %v367 = vunpack.c.l.b16 %v92
    %v368 = vunpack.c.h.b16 %v92
    %v369 = vunpack.c.l.b16 %v93
    %v370 = vunpack.c.h.b16 %v93
    %v371 = vunpack.c.l.b16 %v94
    %v372 = vunpack.c.h.b16 %v94
    %v373 = vunpack.c.l.b16 %v95
    %v374 = vunpack.c.h.b16 %v95
    %v375 = vunpack.c.l.b16 %v96
    %v376 = vunpack.c.h.b16 %v96
    %v377 = vunpack.c.l.b16 %v97
    %v378 = vunpack.c.h.b16 %v97
    %v379 = vunpack.c.l.b16 %v98
    %v380 = vunpack.c.h.b16 %v98
    %v381 = vunpack.c.l.b16 %v99
    %v382 = vunpack.c.h.b16 %v99
    %v383 = vunpack.c.l.b16 %v100
    %v384 = vunpack.c.h.b16 %v100
    %v385 = vunpack.c.l.b16 %v101
    %v386 = vunpack.c.h.b16 %v101
    %v387 = vunpack.c.l.b16 %v102
    %v388 = vunpack.c.h.b16 %v102
    %v389 = vunpack.c.l.b16 %v103
    %v390 = vunpack.c.h.b16 %v103
    %v391 = vunpack.c.l.b16 %v104
    %v392 = vunpack.c.h.b16 %v104
    %v393 = vunpack.c.l.b16 %v105
    %v394 = vunpack.c.h.b16 %v105
    %v395 = vunpack.c.l.b16 %v106
    %v396 = vunpack.c.h.b16 %v106
    %v397 = vunpack.c.l.b16 %v107
    %v398 = vunpack.c.h.b16 %v107
    %v399 = vunpack.c.l.b16 %v108
    %v400 = vunpack.c.h.b16 %v108
    %v401 = vunpack.c.l.b16 %v109
    %v402 = vunpack.c.h.b16 %v109
    %v403 = vunpack.c.l.b16 %v110
    %v404 = vunpack.c.h.b16 %v110
    %v405 = vunpack.c.l.b16 %v111
    %v406 = vunpack.c.h.b16 %v111
    %v407 = vunpack.c.l.b16 %v112
    %v408 = vunpack.c.h.b16 %v112
    %v409 = vunpack.c.l.b16 %v113
    %v410 = vunpack.c.h.b16 %v113
    %v411 = vunpack.c.l.b16 %v114
    %v412 = vunpack.c.h.b16 %v114
    %v413 = vunpack.c.l.b16 %v115
    %v414 = vunpack.c.h.b16 %v115
    %v415 = vunpack.c.l.b16 %v116
    %v416 = vunpack.c.h.b16 %v116
    %v417 = vunpack.c.l.b16 %v117
    %v418 = vunpack.c.h.b16 %v117
    %v419 = vunpack.c.l.b16 %v118
    %v420 = vunpack.c.h.b16 %v118
    %v421 = vunpack.c.l.b16 %v119
    %v422 = vunpack.c.h.b16 %v119
    %v423 = vunpack.c.l.b16 %v120
    %v424 = vunpack.c.h.b16 %v120
    %v425 = vunpack.c.l.b16 %v121
    %v426 = vunpack.c.h.b16 %v121
    %v427 = vunpack.c.l.b16 %v122
    %v428 = vunpack.c.h.b16 %v122
    %v429 = vunpack.c.l.b16 %v123
    %v430 = vunpack.c.h.b16 %v123
    %v431 = vunpack.c.l.b16 %v124
    %v432 = vunpack.c.h.b16 %v124
    %v433 = vunpack.c.l.b16 %v125
    %v434 = vunpack.c.h.b16 %v125
    %v435 = vunpack.c.l.b16 %v126
    %v436 = vunpack.c.h.b16 %v126
    %v437 = vunpack.c.l.b16 %v127
    %v438 = vunpack.c.h.b16 %v127
    %v439 = vunpack.c.l.b16 %v128
    %v440 = vunpack.c.h.b16 %v128
    %v441 = vunpack.c.l.b16 %v129
    %v442 = vunpack.c.h.b16 %v129
    %v443 = vunpack.c.l.b16 %v130
    %v444 = vunpack.c.h.b16 %v130
    %v445 = vunpack.c.l.b16 %v131
    %v446 = vunpack.c.h.b16 %v131
    %v447 = vunpack.c.l.b16 %v132
    %v448 = vunpack.c.h.b16 %v132
    %v449 = vunpack.c.l.b16 %v133
    %v450 = vunpack.c.h.b16 %v133
    %v451 = vunpack.c.l.b16 %v134
    %v452 = vunpack.c.h.b16 %v134
    %v453 = vunpack.c.l.b16 %v135
    %v454 = vunpack.c.h.b16 %v135
    %v455 = vunpack.c.l.b16 %v136
    %v456 = vunpack.c.h.b16 %v136
    %v457 = vunpack.c.l.b16 %v137
    %v458 = vunpack.c.h.b16 %v137
    %v459 = vunpack.c.l.b16 %v138
    %v460 = vunpack.c.h.b16 %v138
    %v461 = vunpack.c.l.b16 %v139
    %v462 = vunpack.c.h.b16 %v139
    %v463 = vunpack.c.l.b16 %v140
    %v464 = vunpack.c.h.b16 %v140
    %v465 = vunpack.c.l.b16 %v141
    %v466 = vunpack.c.h.b16 %v141
    %v467 = vunpack.c.l.b16 %v142
    %v468 = vunpack.c.h.b16 %v142
    %v469 = vunpack.c.l.b16 %v143
    %v470 = vunpack.c.h.b16 %v143
    %v471 = vunpack.c.l.b16 %v144
    %v472 = vunpack.c.h.b16 %v144
    %v473 = vunpack.c.l.b16 %v145
    %v474 = vunpack.c.h.b16 %v145
    %v475 = vunpack.c.l.b16 %v146
    %v476 = vunpack.c.h.b16 %v146
    %v477 = vpack.c.b16 %v287, %v285
    %v478 = vpack.c.b16 %v288, %v286
    %v479 = vpack.c.b16 %v291, %v289
    %v480 = vpack.c.b16 %v292, %v290
    %v481 = vpack.c.b16 %v295, %v293
    %v482 = vpack.c.b16 %v296, %v294
    %v483 = vpack.c.b16 %v299, %v297
    %v484 = vpack.c.b16 %v300, %v298
    %v485 = vpack.c.b16 %v303, %v301
    %v486 = vpack.c.b16 %v304, %v302
    %v487 = vpack.c.b16 %v307, %v305
    %v488 = vpack.c.b16 %v308, %v306
    %v489 = vpack.c.b16 %v311, %v309
    %v490 = vpack.c.b16 %v312, %v310
    %v491 = vpack.c.b16 %v315, %v313
    %v492 = vpack.c.b16 %v316, %v314
    %v493 = vpack.c.b16 %v319, %v317
    %v494 = vpack.c.b16 %v320, %v318
    %v495 = vpack.c.b16 %v323, %v321
    %v496 = vpack.c.b16 %v324, %v322
    %v497 = vpack.c.b16 %v327, %v325
    %v498 = vpack.c.b16 %v328, %v326
    %v499 = vpack.c.b16 %v331, %v329
    %v500 = vpack.c.b16 %v332, %v330
    %v501 = vpack.c.b16 %v335, %v333
    %v502 = vpack.c.b16 %v336, %v334
    %v503 = vpack.c.b16 %v339, %v337
    %v504 = vpack.c.b16 %v340, %v338
    %v505 = vpack.c.b16 %v343, %v341
    %v506 = vpack.c.b16 %v344, %v342
    %v507 = vpack.c.b16 %v347, %v345
    %v508 = vpack.c.b16 %v348, %v346
    %v509 = vpack.c.b16 %v351, %v349
    %v510 = vpack.c.b16 %v352, %v350
    %v511 = vpack.c.b16 %v355, %v353
    %v512 = vpack.c.b16 %v356, %v354
    %v513 = vpack.c.b16 %v359, %v357
    %v514 = vpack.c.b16 %v360, %v358
    %v515 = vpack.c.b16 %v363, %v361
    %v516 = vpack.c.b16 %v364, %v362
    %v517 = vpack.c.b16 %v367, %v365
    %v518 = vpack.c.b16 %v368, %v366
    %v519 = vpack.c.b16 %v371, %v369
    %v520 = vpack.c.b16 %v372, %v370
    %v521 = vpack.c.b16 %v375, %v373
    %v522 = vpack.c.b16 %v376, %v374
    %v523 = vpack.c.b16 %v379, %v377
    %v524 = vpack.c.b16 %v380, %v378
    %v525 = vpack.c.b16 %v383, %v381
    %v526 = vpack.c.b16 %v384, %v382
    %v527 = vpack.c.b16 %v387, %v385
    %v528 = vpack.c.b16 %v388, %v386
    %v529 = vpack.c.b16 %v391, %v389
    %v530 = vpack.c.b16 %v392, %v390
    %v531 = vpack.c.b16 %v395, %v393
    %v532 = vpack.c.b16 %v396, %v394
    %v533 = vpack.c.b16 %v399, %v397
    %v534 = vpack.c.b16 %v400, %v398
    %v535 = vpack.c.b16 %v403, %v401
    %v536 = vpack.c.b16 %v404, %v402
    %v537 = vpack.c.b16 %v407, %v405
    %v538 = vpack.c.b16 %v408, %v406
    %v539 = vpack.c.b16 %v411, %v409
    %v540 = vpack.c.b16 %v412, %v410
    %v541 = vpack.c.b16 %v415, %v413
    %v542 = vpack.c.b16 %v416, %v414
    %v543 = vpack.c.b16 %v419, %v417
    %v544 = vpack.c.b16 %v420, %v418
    %v545 = vpack.c.b16 %v423, %v421
    %v546 = vpack.c.b16 %v424, %v422
    %v547 = vpack.c.b16 %v427, %v425
    %v548 = vpack.c.b16 %v428, %v426
    %v549 = vpack.c.b16 %v431, %v429
    %v550 = vpack.c.b16 %v432, %v430
    %v551 = vpack.c.b16 %v435, %v433
    %v552 = vpack.c.b16 %v436, %v434
    %v553 = vpack.c.b16 %v439, %v437
    %v554 = vpack.c.b16 %v440, %v438
    %v555 = vpack.c.b16 %v443, %v441
    %v556 = vpack.c.b16 %v444, %v442
    %v557 = vpack.c.b16 %v447, %v445
    %v558 = vpack.c.b16 %v448, %v446
    %v559 = vpack.c.b16 %v451, %v449
    %v560 = vpack.c.b16 %v452, %v450
    %v561 = vpack.c.b16 %v455, %v453
    %v562 = vpack.c.b16 %v456, %v454
    %v563 = vpack.c.b16 %v459, %v457
    %v564 = vpack.c.b16 %v460, %v458
    %v565 = vpack.c.b16 %v463, %v461
    %v566 = vpack.c.b16 %v464, %v462
    %v567 = vpack.c.b16 %v467, %v465
    %v568 = vpack.c.b16 %v468, %v466
    %v569 = vpack.c.b16 %v471, %v469
    %v570 = vpack.c.b16 %v472, %v470
    %v571 = vpack.c.b16 %v475, %v473
    %v572 = vpack.c.b16 %v476, %v474
    %669 = vmatprep.subr.bf16.mxu0 %v478
    %670 = vmatpush1.bf16.msra.mxu0 %v477
    %671 = vmatprep.subr.bf16.mxu0 %v480
    %672 = vmatpush1.bf16.msra.mxu0 %v479
    %673 = vmatprep.subr.bf16.mxu0 %v482
    %674 = vmatpush1.bf16.msra.mxu0 %v481
    %675 = vmatprep.subr.bf16.mxu0 %v484
    %676 = vmatpush1.bf16.msra.mxu0 %v483
    %677 = vmatprep.subr.bf16.mxu0 %v486
    %678 = vmatpush1.bf16.msra.mxu0 %v485
    %679 = vmatprep.subr.bf16.mxu0 %v488
    %680 = vmatpush1.bf16.msra.mxu0 %v487
    %681 = vmatprep.subr.bf16.mxu0 %v490
    %682 = vmatpush1.bf16.msra.mxu0 %v489
    %683 = vmatprep.subr.bf16.mxu0 %v492
    %684 = vmatpush1.bf16.msra.mxu0 %v491
    %685 = vmatprep.subr.bf16.mxu0 %v494
    %686 = vmatpush1.bf16.msra.mxu0 %v493
    %687 = vmatprep.subr.bf16.mxu0 %v496
    %688 = vmatpush1.bf16.msra.mxu0 %v495
    %689 = vmatprep.subr.bf16.mxu0 %v498
    %690 = vmatpush1.bf16.msra.mxu0 %v497
    %691 = vmatprep.subr.bf16.mxu0 %v500
    %692 = vmatpush1.bf16.msra.mxu0 %v499
    %693 = vmatprep.subr.bf16.mxu0 %v502
    %694 = vmatpush1.bf16.msra.mxu0 %v501
    %695 = vmatprep.subr.bf16.mxu0 %v504
    %696 = vmatpush1.bf16.msra.mxu0 %v503
    %697 = vmatprep.subr.bf16.mxu0 %v506
    %698 = vmatpush1.bf16.msra.mxu0 %v505
    %699 = vmatprep.subr.bf16.mxu0 %v508
    %700 = vmatpush1.bf16.msra.mxu0 %v507
    %701 = vmatprep.mubr.bf16.mxu0 %v178
    %702 = vmatmul.mubr.bf16.gmra.mrb[0].mxu0 %v177
    %v703 = vpop.f32.mrb[0].mxu0
    %v704 = vadd.f32 %v152, %v703
    %v705 = vpop.f32.mrb[0].mxu0
    %v706 = vadd.f32 %v156, %v705
    %v707 = vpop.f32.mrb[0].mxu0
    %v708 = vadd.f32 %v152, %v707
    %v709 = vpop.f32.mrb[0].mxu0
    %v710 = vadd.f32 %v156, %v709
    %711 = vdwg.mxu0
    %712 = vmatprep.subr.bf16.mxu0 %v510
    %713 = vmatpush1.bf16.msra.mxu0 %v509
    %714 = vmatprep.subr.bf16.mxu0 %v512
    %715 = vmatpush1.bf16.msra.mxu0 %v511
    %716 = vmatprep.subr.bf16.mxu0 %v514
    %717 = vmatpush1.bf16.msra.mxu0 %v513
    %718 = vmatprep.subr.bf16.mxu0 %v516
    %719 = vmatpush1.bf16.msra.mxu0 %v515
    %720 = vmatprep.subr.bf16.mxu0 %v518
    %721 = vmatpush1.bf16.msra.mxu0 %v517
    %722 = vmatprep.subr.bf16.mxu0 %v520
    %723 = vmatpush1.bf16.msra.mxu0 %v519
    %724 = vmatprep.subr.bf16.mxu0 %v522
    %725 = vmatpush1.bf16.msra.mxu0 %v521
    %726 = vmatprep.subr.bf16.mxu0 %v524
    %727 = vmatpush1.bf16.msra.mxu0 %v523
    %728 = vmatprep.subr.bf16.mxu0 %v526
    %729 = vmatpush1.bf16.msra.mxu0 %v525
    %730 = vmatprep.subr.bf16.mxu0 %v528
    %731 = vmatpush1.bf16.msra.mxu0 %v527
    %732 = vmatprep.subr.bf16.mxu0 %v530
    %733 = vmatpush1.bf16.msra.mxu0 %v529
    %734 = vmatprep.subr.bf16.mxu0 %v532
    %735 = vmatpush1.bf16.msra.mxu0 %v531
    %736 = vmatprep.subr.bf16.mxu0 %v534
    %737 = vmatpush1.bf16.msra.mxu0 %v533
    %738 = vmatprep.subr.bf16.mxu0 %v536
    %739 = vmatpush1.bf16.msra.mxu0 %v535
    %740 = vmatprep.subr.bf16.mxu0 %v538
    %741 = vmatpush1.bf16.msra.mxu0 %v537
    %742 = vmatprep.subr.bf16.mxu0 %v540
    %743 = vmatpush1.bf16.msra.mxu0 %v539
    %744 = vmatprep.mubr.bf16.mxu0 %v180
    %745 = vmatmul.mubr.bf16.gmra.mrb[0].mxu0 %v179
    %v746 = vpop.f32.mrb[0].mxu0
    %v747 = vadd.f32 %v704, %v746
    %v748 = vpop.f32.mrb[0].mxu0
    %v749 = vadd.f32 %v706, %v748
    %v750 = vpop.f32.mrb[0].mxu0
    %v751 = vadd.f32 %v708, %v750
    %v752 = vpop.f32.mrb[0].mxu0
    %v753 = vadd.f32 %v710, %v752
    %754 = vdwg.mxu0
    %755 = vmatprep.subr.bf16.mxu0 %v542
    %756 = vmatpush1.bf16.msra.mxu0 %v541
    %757 = vmatprep.subr.bf16.mxu0 %v544
    %758 = vmatpush1.bf16.msra.mxu0 %v543
    %759 = vmatprep.subr.bf16.mxu0 %v546
    %760 = vmatpush1.bf16.msra.mxu0 %v545
    %761 = vmatprep.subr.bf16.mxu0 %v548
    %762 = vmatpush1.bf16.msra.mxu0 %v547
    %763 = vmatprep.subr.bf16.mxu0 %v550
    %764 = vmatpush1.bf16.msra.mxu0 %v549
    %765 = vmatprep.subr.bf16.mxu0 %v552
    %766 = vmatpush1.bf16.msra.mxu0 %v551
    %767 = vmatprep.subr.bf16.mxu0 %v554
    %768 = vmatpush1.bf16.msra.mxu0 %v553
    %769 = vmatprep.subr.bf16.mxu0 %v556
    %770 = vmatpush1.bf16.msra.mxu0 %v555
    %771 = vmatprep.subr.bf16.mxu0 %v558
    %772 = vmatpush1.bf16.msra.mxu0 %v557
    %773 = vmatprep.subr.bf16.mxu0 %v560
    %774 = vmatpush1.bf16.msra.mxu0 %v559
    %775 = vmatprep.subr.bf16.mxu0 %v562
    %776 = vmatpush1.bf16.msra.mxu0 %v561
    %777 = vmatprep.subr.bf16.mxu0 %v564
    %778 = vmatpush1.bf16.msra.mxu0 %v563
    %779 = vmatprep.subr.bf16.mxu0 %v566
    %780 = vmatpush1.bf16.msra.mxu0 %v565
    %781 = vmatprep.subr.bf16.mxu0 %v568
    %782 = vmatpush1.bf16.msra.mxu0 %v567
    %783 = vmatprep.subr.bf16.mxu0 %v570
    %784 = vmatpush1.bf16.msra.mxu0 %v569
    %785 = vmatprep.subr.bf16.mxu0 %v572
    %786 = vmatpush1.bf16.msra.mxu0 %v571
    %787 = vmatprep.mubr.bf16.mxu0 %v182
    %788 = vmatmul.mubr.bf16.gmra.mrb[0].mxu0 %v181
    %v789 = vpop.f32.mrb[0].mxu0
    %v790 = vadd.f32 %v747, %v789
    %v791 = vpop.f32.mrb[0].mxu0
    %v792 = vadd.f32 %v749, %v791
    %v793 = vpop.f32.mrb[0].mxu0
    %v794 = vadd.f32 %v751, %v793
    %v795 = vpop.f32.mrb[0].mxu0
    %v796 = vadd.f32 %v753, %v795
    %797 = vdwg.mxu0
    %v798 = vld [vmem:[%s3] sm:$0xff]
    %v799 = vld [vmem:[%s3 + $0x8] sm:$0xff]
    %v800 = vld [vmem:[%s3 + $0x10] sm:$0xff]
    %v801 = vld [vmem:[%s3 + $0x18] sm:$0xff]
    %v802 = vld [vmem:[%s3 + $0x20] sm:$0xff]
    %v803 = vld [vmem:[%s3 + $0x28] sm:$0xff]
    %v804 = vld [vmem:[%s3 + $0x30] sm:$0xff]
    %v805 = vld [vmem:[%s3 + $0x38] sm:$0xff]
    %v806 = vld [vmem:[%s3 + $0x40] sm:$0xff]
    %v807 = vld [vmem:[%s3 + $0x48] sm:$0xff]
    %v808 = vld [vmem:[%s3 + $0x50] sm:$0xff]
    %v809 = vld [vmem:[%s3 + $0x58] sm:$0xff]
    %v810 = vld [vmem:[%s3 + $0x60] sm:$0xff]
    %v811 = vld [vmem:[%s3 + $0x68] sm:$0xff]
    %v812 = vld [vmem:[%s3 + $0x70] sm:$0xff]
    %v813 = vld [vmem:[%s3 + $0x78] sm:$0xff]
    %v814 = vld [vmem:[%s3 + $0x80] sm:$0xff]
    %v815 = vld [vmem:[%s3 + $0x88] sm:$0xff]
    %v816 = vld [vmem:[%s3 + $0x90] sm:$0xff]
    %v817 = vld [vmem:[%s3 + $0x98] sm:$0xff]
    %v818 = vld [vmem:[%s3 + $0xa0] sm:$0xff]
    %v819 = vld [vmem:[%s3 + $0xa8] sm:$0xff]
    %v820 = vld [vmem:[%s3 + $0xb0] sm:$0xff]
    %v821 = vld [vmem:[%s3 + $0xb8] sm:$0xff]
    %v822 = vld [vmem:[%s3 + $0xc0] sm:$0xff]
    %v823 = vld [vmem:[%s3 + $0xc8] sm:$0xff]
    %v824 = vld [vmem:[%s3 + $0xd0] sm:$0xff]
    %v825 = vld [vmem:[%s3 + $0xd8] sm:$0xff]
    %v826 = vld [vmem:[%s3 + $0xe0] sm:$0xff]
    %v827 = vld [vmem:[%s3 + $0xe8] sm:$0xff]
    %v828 = vld [vmem:[%s3 + $0xf0] sm:$0xff]
    %v829 = vld [vmem:[%s3 + $0xf8] sm:$0xff]
    %830 = vmatprep.subr.mxu0 0.0
    %831 = vmatpush1.msra.mxu0 %v798
    %832 = vmatprep.subr.mxu0 0.0
    %833 = vmatpush1.msra.mxu0 %v799
    %834 = vmatprep.subr.mxu0 0.0
    %835 = vmatpush1.msra.mxu0 %v800
    %836 = vmatprep.subr.mxu0 0.0
    %837 = vmatpush1.msra.mxu0 %v801
    %838 = vmatprep.subr.mxu0 0.0
    %839 = vmatpush1.msra.mxu0 %v802
    %840 = vmatprep.subr.mxu0 0.0
    %841 = vmatpush1.msra.mxu0 %v803
    %842 = vmatprep.subr.mxu0 0.0
    %843 = vmatpush1.msra.mxu0 %v804
    %844 = vmatprep.subr.mxu0 0.0
    %845 = vmatpush1.msra.mxu0 %v805
    %846 = vmatprep.subr.mxu0 0.0
    %847 = vmatpush1.msra.mxu0 %v806
    %848 = vmatprep.subr.mxu0 0.0
    %849 = vmatpush1.msra.mxu0 %v807
    %850 = vmatprep.subr.mxu0 0.0
    %851 = vmatpush1.msra.mxu0 %v808
    %852 = vmatprep.subr.mxu0 0.0
    %853 = vmatpush1.msra.mxu0 %v809
    %854 = vmatprep.subr.mxu0 0.0
    %855 = vmatpush1.msra.mxu0 %v810
    %856 = vmatprep.subr.mxu0 0.0
    %857 = vmatpush1.msra.mxu0 %v811
    %858 = vmatprep.subr.mxu0 0.0
    %859 = vmatpush1.msra.mxu0 %v812
    %860 = vmatprep.subr.mxu0 0.0
    %861 = vmatpush1.msra.mxu0 %v813
    %862 = vmatprep.subr.mxu0 0.0
    %863 = vmatpush1.msra.mxu0 %v814
    %864 = vmatprep.subr.mxu0 0.0
    %865 = vmatpush1.msra.mxu0 %v815
    %866 = vmatprep.subr.mxu0 0.0
    %867 = vmatpush1.msra.mxu0 %v816
    %868 = vmatprep.subr.mxu0 0.0
    %869 = vmatpush1.msra.mxu0 %v817
    %870 = vmatprep.subr.mxu0 0.0
    %871 = vmatpush1.msra.mxu0 %v818
    %872 = vmatprep.subr.mxu0 0.0
    %873 = vmatpush1.msra.mxu0 %v819
    %874 = vmatprep.subr.mxu0 0.0
    %875 = vmatpush1.msra.mxu0 %v820
    %876 = vmatprep.subr.mxu0 0.0
    %877 = vmatpush1.msra.mxu0 %v821
    %878 = vmatprep.subr.mxu0 0.0
    %879 = vmatpush1.msra.mxu0 %v822
    %880 = vmatprep.subr.mxu0 0.0
    %881 = vmatpush1.msra.mxu0 %v823
    %882 = vmatprep.subr.mxu0 0.0
    %883 = vmatpush1.msra.mxu0 %v824
    %884 = vmatprep.subr.mxu0 0.0
    %885 = vmatpush1.msra.mxu0 %v825
    %886 = vmatprep.subr.mxu0 0.0
    %887 = vmatpush1.msra.mxu0 %v826
    %888 = vmatprep.subr.mxu0 0.0
    %889 = vmatpush1.msra.mxu0 %v827
    %890 = vmatprep.subr.mxu0 0.0
    %891 = vmatpush1.msra.mxu0 %v828
    %892 = vmatprep.subr.mxu0 0.0
    %893 = vmatpush1.msra.mxu0 %v829
    %894 = vmatprep.mubr.f32.mxu0 %v792
    %895 = vmatmul.mubr.f32.gmra.mrb[0].mxu0 %v790
    %v896 = vpop.f32.mrb[0].mxu0
    %v897 = vadd.f32 0.0, %v896
    %v898 = vpop.f32.mrb[0].mxu0
    %899 = vmatprep.mubr.f32.mxu0 %v796
    %900 = vmatmul.mubr.f32.gmra.mrb[0].mxu0 %v794
    %v901 = vpop.f32.mrb[0].mxu0
    %v902 = vadd.f32 0.0, %v901
    %v903 = vpop.f32.mrb[0].mxu0
    %904 = vdwg.mxu0
    %v905 = vmul.f32 %v790, %v790
    %v906 = vmul.f32 %v792, %v792
    %v907 = vmul.f32 %v794, %v794
    %v908 = vmul.f32 %v796, %v796
    %909 = vmatprep.subr.mxu0 0.0
    %910 = vmatpush1.msra.mxu0 %v798
    %911 = vmatprep.subr.mxu0 0.0
    %912 = vmatpush1.msra.mxu0 %v799
    %913 = vmatprep.subr.mxu0 0.0
    %914 = vmatpush1.msra.mxu0 %v800
    %915 = vmatprep.subr.mxu0 0.0
    %916 = vmatpush1.msra.mxu0 %v801
    %917 = vmatprep.subr.mxu0 0.0
    %918 = vmatpush1.msra.mxu0 %v802
    %919 = vmatprep.subr.mxu0 0.0
    %920 = vmatpush1.msra.mxu0 %v803
    %921 = vmatprep.subr.mxu0 0.0
    %922 = vmatpush1.msra.mxu0 %v804
    %923 = vmatprep.subr.mxu0 0.0
    %924 = vmatpush1.msra.mxu0 %v805
    %925 = vmatprep.subr.mxu0 0.0
    %926 = vmatpush1.msra.mxu0 %v806
    %927 = vmatprep.subr.mxu0 0.0
    %928 = vmatpush1.msra.mxu0 %v807
    %929 = vmatprep.subr.mxu0 0.0
    %930 = vmatpush1.msra.mxu0 %v808
    %931 = vmatprep.subr.mxu0 0.0
    %932 = vmatpush1.msra.mxu0 %v809
    %933 = vmatprep.subr.mxu0 0.0
    %934 = vmatpush1.msra.mxu0 %v810
    %935 = vmatprep.subr.mxu0 0.0
    %936 = vmatpush1.msra.mxu0 %v811
    %937 = vmatprep.subr.mxu0 0.0
    %938 = vmatpush1.msra.mxu0 %v812
    %939 = vmatprep.subr.mxu0 0.0
    %940 = vmatpush1.msra.mxu0 %v813
    %941 = vmatprep.subr.mxu0 0.0
    %942 = vmatpush1.msra.mxu0 %v814
    %943 = vmatprep.subr.mxu0 0.0
    %944 = vmatpush1.msra.mxu0 %v815
    %945 = vmatprep.subr.mxu0 0.0
    %946 = vmatpush1.msra.mxu0 %v816
    %947 = vmatprep.subr.mxu0 0.0
    %948 = vmatpush1.msra.mxu0 %v817
    %949 = vmatprep.subr.mxu0 0.0
    %950 = vmatpush1.msra.mxu0 %v818
    %951 = vmatprep.subr.mxu0 0.0
    %952 = vmatpush1.msra.mxu0 %v819
    %953 = vmatprep.subr.mxu0 0.0
    %954 = vmatpush1.msra.mxu0 %v820
    %955 = vmatprep.subr.mxu0 0.0
    %956 = vmatpush1.msra.mxu0 %v821
    %957 = vmatprep.subr.mxu0 0.0
    %958 = vmatpush1.msra.mxu0 %v822
    %959 = vmatprep.subr.mxu0 0.0
    %960 = vmatpush1.msra.mxu0 %v823
    %961 = vmatprep.subr.mxu0 0.0
    %962 = vmatpush1.msra.mxu0 %v824
    %963 = vmatprep.subr.mxu0 0.0
    %964 = vmatpush1.msra.mxu0 %v825
    %965 = vmatprep.subr.mxu0 0.0
    %966 = vmatpush1.msra.mxu0 %v826
    %967 = vmatprep.subr.mxu0 0.0
    %968 = vmatpush1.msra.mxu0 %v827
    %969 = vmatprep.subr.mxu0 0.0
    %970 = vmatpush1.msra.mxu0 %v828
    %971 = vmatprep.subr.mxu0 0.0
    %972 = vmatpush1.msra.mxu0 %v829
    %973 = vmatprep.mubr.f32.mxu0 %v906
    %974 = vmatmul.mubr.f32.gmra.mrb[0].mxu0 %v905
    %v975 = vpop.f32.mrb[0].mxu0
    %v976 = vadd.f32 0.0, %v975
    %v977 = vpop.f32.mrb[0].mxu0
    %978 = vmatprep.mubr.f32.mxu0 %v908
    %979 = vmatmul.mubr.f32.gmra.mrb[0].mxu0 %v907
    %v980 = vpop.f32.mrb[0].mxu0
    %v981 = vadd.f32 0.0, %v980
    %v982 = vpop.f32.mrb[0].mxu0
    %983 = vdwg.mxu0
    %v984 = vmul.f32 %v897, %v897
    %v985 = vmul.f32 %v902, %v902
    %v986 = vsub.f32 %v976, %v984
    %v987 = vsub.f32 %v981, %v985
    %v988 = vmax.f32 %v986, 0.0
    %v989 = vmax.f32 %v987, 0.0
    %v990 = vadd.f32 %v988, 1e-05
    %v991 = vadd.f32 %v989, 1e-05
    %v992 = vrsqrt.pop %v990
    %v993 = vrsqrt.pop %v991
    %v994 = vsub.f32 0.0, %v897
    %v995 = vsub.f32 0.0, %v902
    %v996 = vmul.f32 %v994, %v992
    %v997 = vmul.f32 %v995, %v993
    %v998 = vld [vmem:[%s4] sm:$0xff]
    %v999 = vld [vmem:[%s4 + $0x8] sm:$0xff]
    %v1000 = vld [vmem:[%s4 + $0x10] sm:$0xff]
    %v1001 = vld [vmem:[%s4 + $0x18] sm:$0xff]
    %v1002 = vld [vmem:[%s4 + $0x20] sm:$0xff]
    %v1003 = vld [vmem:[%s4 + $0x28] sm:$0xff]
    %v1004 = vld [vmem:[%s4 + $0x30] sm:$0xff]
    %v1005 = vld [vmem:[%s4 + $0x38] sm:$0xff]
    %vm1006 = vcmask 261120
    %v1008 = vsel %vm1006, %v992, 0
    %v1011 = vsel %vm1006, %v993, 0
    %1013 = vmatprep.subr.mxu0 %v999
    %1014 = vmatpush1.msra.mxu0 %v998
    %1015 = vmatprep.subr.mxu0 %v1001
    %1016 = vmatpush1.msra.mxu0 %v1000
    %1017 = vmatprep.subr.mxu0 %v1003
    %1018 = vmatpush1.msra.mxu0 %v1002
    %1019 = vmatprep.subr.mxu0 %v1005
    %1020 = vmatpush1.msra.mxu0 %v1004
    %1021 = vmatprep.subr.mxu0 0.0
    %1022 = vmatpush1.msra.mxu0 0.0
    %1023 = vmatprep.subr.mxu0 0.0
    %1024 = vmatpush1.msra.mxu0 0.0
    %1025 = vmatprep.subr.mxu0 0.0
    %1026 = vmatpush1.msra.mxu0 0.0
    %1027 = vmatprep.subr.mxu0 0.0
    %1028 = vmatpush1.msra.mxu0 0.0
    %1029 = vmatprep.subr.mxu0 0.0
    %1030 = vmatpush1.msra.mxu0 0.0
    %1031 = vmatprep.subr.mxu0 0.0
    %1032 = vmatpush1.msra.mxu0 0.0
    %1033 = vmatprep.subr.mxu0 0.0
    %1034 = vmatpush1.msra.mxu0 0.0
    %1035 = vmatprep.subr.mxu0 0.0
    %1036 = vmatpush1.msra.mxu0 0.0
    %1037 = vmatprep.subr.mxu0 0.0
    %1038 = vmatpush1.msra.mxu0 0.0
    %1039 = vmatprep.subr.mxu0 0.0
    %1040 = vmatpush1.msra.mxu0 0.0
    %1041 = vmatprep.subr.mxu0 0.0
    %1042 = vmatpush1.msra.mxu0 0.0
    %1043 = vmatprep.subr.mxu0 0.0
    %1044 = vmatpush1.msra.mxu0 0.0
    %1045 = vmatprep.subr.mxu0 0.0
    %1046 = vmatpush1.msra.mxu0 0.0
    %1047 = vmatprep.subr.mxu0 0.0
    %1048 = vmatpush1.msra.mxu0 0.0
    %1049 = vmatprep.subr.mxu0 0.0
    %1050 = vmatpush1.msra.mxu0 0.0
    %1051 = vmatprep.subr.mxu0 0.0
    %1052 = vmatpush1.msra.mxu0 0.0
    %1053 = vmatprep.subr.mxu0 0.0
    %1054 = vmatpush1.msra.mxu0 0.0
    %1055 = vmatprep.subr.mxu0 0.0
    %1056 = vmatpush1.msra.mxu0 0.0
    %1057 = vmatprep.subr.mxu0 0.0
    %1058 = vmatpush1.msra.mxu0 0.0
    %1059 = vmatprep.subr.mxu0 0.0
    %1060 = vmatpush1.msra.mxu0 0.0
    %1061 = vmatprep.subr.mxu0 0.0
    %1062 = vmatpush1.msra.mxu0 0.0
    %1063 = vmatprep.subr.mxu0 0.0
    %1064 = vmatpush1.msra.mxu0 0.0
    %1065 = vmatprep.subr.mxu0 0.0
    %1066 = vmatpush1.msra.mxu0 0.0
    %1067 = vmatprep.subr.mxu0 0.0
    %1068 = vmatpush1.msra.mxu0 0.0
    %1069 = vmatprep.subr.mxu0 0.0
    %1070 = vmatpush1.msra.mxu0 0.0
    %1071 = vmatprep.subr.mxu0 0.0
    %1072 = vmatpush1.msra.mxu0 0.0
    %1073 = vmatprep.subr.mxu0 0.0
    %1074 = vmatpush1.msra.mxu0 0.0
    %1075 = vmatprep.subr.mxu0 0.0
    %1076 = vmatpush1.msra.mxu0 0.0
    %1077 = vmatprep.mubr.f32.mxu0 0.0
    %1078 = vmatmul.mubr.f32.gmra.mrb[0].mxu0 %v1008
    %v1079 = vpop.f32.mrb[0].mxu0
    %v1080 = vadd.f32 0.0, %v1079
    %v1081 = vpop.f32.mrb[0].mxu0
    %v1082 = vadd.f32 0.0, %v1081
    %1083 = vmatprep.mubr.f32.mxu0 0.0
    %1084 = vmatmul.mubr.f32.gmra.mrb[0].mxu0 %v1011
    %v1085 = vpop.f32.mrb[0].mxu0
    %v1086 = vadd.f32 0.0, %v1085
    %v1087 = vpop.f32.mrb[0].mxu0
    %v1088 = vadd.f32 0.0, %v1087
    %1089 = vdwg.mxu0
    %v1091 = vsel %vm1006, %v996, 0
    %v1094 = vsel %vm1006, %v997, 0
    %1096 = vmatprep.subr.mxu0 %v999
    %1097 = vmatpush1.msra.mxu0 %v998
    %1098 = vmatprep.subr.mxu0 %v1001
    %1099 = vmatpush1.msra.mxu0 %v1000
    %1100 = vmatprep.subr.mxu0 %v1003
    %1101 = vmatpush1.msra.mxu0 %v1002
    %1102 = vmatprep.subr.mxu0 %v1005
    %1103 = vmatpush1.msra.mxu0 %v1004
    %1104 = vmatprep.subr.mxu0 0.0
    %1105 = vmatpush1.msra.mxu0 0.0
    %1106 = vmatprep.subr.mxu0 0.0
    %1107 = vmatpush1.msra.mxu0 0.0
    %1108 = vmatprep.subr.mxu0 0.0
    %1109 = vmatpush1.msra.mxu0 0.0
    %1110 = vmatprep.subr.mxu0 0.0
    %1111 = vmatpush1.msra.mxu0 0.0
    %1112 = vmatprep.subr.mxu0 0.0
    %1113 = vmatpush1.msra.mxu0 0.0
    %1114 = vmatprep.subr.mxu0 0.0
    %1115 = vmatpush1.msra.mxu0 0.0
    %1116 = vmatprep.subr.mxu0 0.0
    %1117 = vmatpush1.msra.mxu0 0.0
    %1118 = vmatprep.subr.mxu0 0.0
    %1119 = vmatpush1.msra.mxu0 0.0
    %1120 = vmatprep.subr.mxu0 0.0
    %1121 = vmatpush1.msra.mxu0 0.0
    %1122 = vmatprep.subr.mxu0 0.0
    %1123 = vmatpush1.msra.mxu0 0.0
    %1124 = vmatprep.subr.mxu0 0.0
    %1125 = vmatpush1.msra.mxu0 0.0
    %1126 = vmatprep.subr.mxu0 0.0
    %1127 = vmatpush1.msra.mxu0 0.0
    %1128 = vmatprep.subr.mxu0 0.0
    %1129 = vmatpush1.msra.mxu0 0.0
    %1130 = vmatprep.subr.mxu0 0.0
    %1131 = vmatpush1.msra.mxu0 0.0
    %1132 = vmatprep.subr.mxu0 0.0
    %1133 = vmatpush1.msra.mxu0 0.0
    %1134 = vmatprep.subr.mxu0 0.0
    %1135 = vmatpush1.msra.mxu0 0.0
    %1136 = vmatprep.subr.mxu0 0.0
    %1137 = vmatpush1.msra.mxu0 0.0
    %1138 = vmatprep.subr.mxu0 0.0
    %1139 = vmatpush1.msra.mxu0 0.0
    %1140 = vmatprep.subr.mxu0 0.0
    %1141 = vmatpush1.msra.mxu0 0.0
    %1142 = vmatprep.subr.mxu0 0.0
    %1143 = vmatpush1.msra.mxu0 0.0
    %1144 = vmatprep.subr.mxu0 0.0
    %1145 = vmatpush1.msra.mxu0 0.0
    %1146 = vmatprep.subr.mxu0 0.0
    %1147 = vmatpush1.msra.mxu0 0.0
    %1148 = vmatprep.subr.mxu0 0.0
    %1149 = vmatpush1.msra.mxu0 0.0
    %1150 = vmatprep.subr.mxu0 0.0
    %1151 = vmatpush1.msra.mxu0 0.0
    %1152 = vmatprep.subr.mxu0 0.0
    %1153 = vmatpush1.msra.mxu0 0.0
    %1154 = vmatprep.subr.mxu0 0.0
    %1155 = vmatpush1.msra.mxu0 0.0
    %1156 = vmatprep.subr.mxu0 0.0
    %1157 = vmatpush1.msra.mxu0 0.0
    %1158 = vmatprep.subr.mxu0 0.0
    %1159 = vmatpush1.msra.mxu0 0.0
    %1160 = vmatprep.mubr.f32.mxu0 0.0
    %1161 = vmatmul.mubr.f32.gmra.mrb[0].mxu0 %v1091
    %v1162 = vpop.f32.mrb[0].mxu0
    %v1163 = vadd.f32 0.0, %v1162
    %v1164 = vpop.f32.mrb[0].mxu0
    %v1165 = vadd.f32 0.0, %v1164
    %1166 = vmatprep.mubr.f32.mxu0 0.0
    %1167 = vmatmul.mubr.f32.gmra.mrb[0].mxu0 %v1094
    %v1168 = vpop.f32.mrb[0].mxu0
    %v1169 = vadd.f32 0.0, %v1168
    %v1170 = vpop.f32.mrb[0].mxu0
    %v1171 = vadd.f32 0.0, %v1170
    %1172 = vdwg.mxu0
    %v1173 = vmul.f32 %v790, %v1080
    %v1174 = vmul.f32 %v792, %v1082
    %v1175 = vmul.f32 %v794, %v1086
    %v1176 = vmul.f32 %v796, %v1088
    %v1177 = vadd.f32 %v1173, %v1163
    %v1178 = vadd.f32 %v1174, %v1165
    %v1179 = vadd.f32 %v1175, %v1169
    %v1180 = vadd.f32 %v1176, %v1171
    %v1181 = vld [vmem:[%s5] sm:$0x3]
    %v1183 = vlaneseq
    %v1184 = vshrl.u32 %v1183, 7
    %v1185 = vsub.s32 0, %v1184
    %v1186 = vrot.slane %v1181, %v1185
    %v1187 = vlaneseq
    %v1188 = vshrl.u32 %v1187, 7
    %v1189 = vsub.s32 1, %v1188
    %v1190 = vrot.slane %v1181, %v1189
    %v1193 = vadd.f32 %v1177, %v1186
    %v1194 = vadd.f32 %v1178, %v1190
    %v1195 = vadd.f32 %v1179, %v1186
    %v1196 = vadd.f32 %v1180, %v1190
    %v1197 = vmax.f32 %v1193, 0.0
    %v1198 = vmax.f32 %v1194, 0.0
    %v1199 = vmax.f32 %v1195, 0.0
    %v1200 = vmax.f32 %v1196, 0.0
    %v1201 = vpack.c.bf16 %v1199, %v1197
    %v1202 = vpack.c.bf16 %v1200, %v1198
    %v1203 = vld [vmem:[%s6] sm:$0xf]
    %v1204 = vld [vmem:[%s6 + $0x4] sm:$0xf]
    %v1205 = vld [vmem:[%s6 + $0x8] sm:$0xf]
    %v1206 = vld [vmem:[%s6 + $0xc] sm:$0xf]
    %v1207 = vld [vmem:[%s6 + $0x10] sm:$0xf]
    %v1208 = vld [vmem:[%s6 + $0x14] sm:$0xf]
    %v1209 = vld [vmem:[%s6 + $0x18] sm:$0xf]
    %v1210 = vld [vmem:[%s6 + $0x1c] sm:$0xf]
    %v1211 = vld [vmem:[%s6 + $0x20] sm:$0xf]
    %v1212 = vld [vmem:[%s6 + $0x24] sm:$0xf]
    %v1213 = vld [vmem:[%s6 + $0x28] sm:$0xf]
    %v1214 = vld [vmem:[%s6 + $0x2c] sm:$0xf]
    %v1215 = vld [vmem:[%s6 + $0x30] sm:$0xf]
    %v1216 = vld [vmem:[%s6 + $0x34] sm:$0xf]
    %v1217 = vld [vmem:[%s6 + $0x38] sm:$0xf]
    %v1218 = vld [vmem:[%s6 + $0x3c] sm:$0xf]
    %v1219 = vld [vmem:[%s6 + $0x40] sm:$0xf]
    %v1220 = vld [vmem:[%s6 + $0x44] sm:$0xf]
    %v1221 = vld [vmem:[%s6 + $0x48] sm:$0xf]
    %v1222 = vld [vmem:[%s6 + $0x4c] sm:$0xf]
    %v1223 = vld [vmem:[%s6 + $0x50] sm:$0xf]
    %v1224 = vld [vmem:[%s6 + $0x54] sm:$0xf]
    %v1225 = vld [vmem:[%s6 + $0x58] sm:$0xf]
    %v1226 = vld [vmem:[%s6 + $0x5c] sm:$0xf]
    %v1227 = vld [vmem:[%s6 + $0x60] sm:$0xf]
    %v1228 = vld [vmem:[%s6 + $0x64] sm:$0xf]
    %v1229 = vld [vmem:[%s6 + $0x68] sm:$0xf]
    %v1230 = vld [vmem:[%s6 + $0x6c] sm:$0xf]
    %v1231 = vld [vmem:[%s6 + $0x70] sm:$0xf]
    %v1232 = vld [vmem:[%s6 + $0x74] sm:$0xf]
    %v1233 = vld [vmem:[%s6 + $0x78] sm:$0xf]
    %v1234 = vld [vmem:[%s6 + $0x7c] sm:$0xf]
    %v1235 = vld [vmem:[%s7] sm:$0x1]
    %v1237 = vlaneseq
    %v1238 = vshrl.u32 %v1237, 7
    %v1239 = vsub.s32 0, %v1238
    %v1240 = vrot.slane %v1235, %v1239
    %v1274 = vunpack.c.l.b16 %v1203
    %v1275 = vunpack.c.l.b16 %v1204
    %v1276 = vunpack.c.l.b16 %v1205
    %v1277 = vunpack.c.l.b16 %v1206
    %v1278 = vunpack.c.l.b16 %v1207
    %v1279 = vunpack.c.l.b16 %v1208
    %v1280 = vunpack.c.l.b16 %v1209
    %v1281 = vunpack.c.l.b16 %v1210
    %v1282 = vunpack.c.l.b16 %v1211
    %v1283 = vunpack.c.l.b16 %v1212
    %v1284 = vunpack.c.l.b16 %v1213
    %v1285 = vunpack.c.l.b16 %v1214
    %v1286 = vunpack.c.l.b16 %v1215
    %v1287 = vunpack.c.l.b16 %v1216
    %v1288 = vunpack.c.l.b16 %v1217
    %v1289 = vunpack.c.l.b16 %v1218
    %v1290 = vunpack.c.l.b16 %v1219
    %v1291 = vunpack.c.l.b16 %v1220
    %v1292 = vunpack.c.l.b16 %v1221
    %v1293 = vunpack.c.l.b16 %v1222
    %v1294 = vunpack.c.l.b16 %v1223
    %v1295 = vunpack.c.l.b16 %v1224
    %v1296 = vunpack.c.l.b16 %v1225
    %v1297 = vunpack.c.l.b16 %v1226
    %v1298 = vunpack.c.l.b16 %v1227
    %v1299 = vunpack.c.l.b16 %v1228
    %v1300 = vunpack.c.l.b16 %v1229
    %v1301 = vunpack.c.l.b16 %v1230
    %v1302 = vunpack.c.l.b16 %v1231
    %v1303 = vunpack.c.l.b16 %v1232
    %v1304 = vunpack.c.l.b16 %v1233
    %v1305 = vunpack.c.l.b16 %v1234
    %v1306 = vpack.c.b16 %v1275, %v1274
    %v1307 = vpack.c.b16 %v1277, %v1276
    %v1308 = vpack.c.b16 %v1279, %v1278
    %v1309 = vpack.c.b16 %v1281, %v1280
    %v1310 = vpack.c.b16 %v1283, %v1282
    %v1311 = vpack.c.b16 %v1285, %v1284
    %v1312 = vpack.c.b16 %v1287, %v1286
    %v1313 = vpack.c.b16 %v1289, %v1288
    %v1314 = vpack.c.b16 %v1291, %v1290
    %v1315 = vpack.c.b16 %v1293, %v1292
    %v1316 = vpack.c.b16 %v1295, %v1294
    %v1317 = vpack.c.b16 %v1297, %v1296
    %v1318 = vpack.c.b16 %v1299, %v1298
    %v1319 = vpack.c.b16 %v1301, %v1300
    %v1320 = vpack.c.b16 %v1303, %v1302
    %v1321 = vpack.c.b16 %v1305, %v1304
    %1338 = vmatprep.subr.bf16.mxu0 0
    %1339 = vmatpush1.bf16.msra.mxu0 %v1306
    %1340 = vmatprep.subr.bf16.mxu0 0
    %1341 = vmatpush1.bf16.msra.mxu0 %v1307
    %1342 = vmatprep.subr.bf16.mxu0 0
    %1343 = vmatpush1.bf16.msra.mxu0 %v1308
    %1344 = vmatprep.subr.bf16.mxu0 0
    %1345 = vmatpush1.bf16.msra.mxu0 %v1309
    %1346 = vmatprep.subr.bf16.mxu0 0
    %1347 = vmatpush1.bf16.msra.mxu0 %v1310
    %1348 = vmatprep.subr.bf16.mxu0 0
    %1349 = vmatpush1.bf16.msra.mxu0 %v1311
    %1350 = vmatprep.subr.bf16.mxu0 0
    %1351 = vmatpush1.bf16.msra.mxu0 %v1312
    %1352 = vmatprep.subr.bf16.mxu0 0
    %1353 = vmatpush1.bf16.msra.mxu0 %v1313
    %1354 = vmatprep.subr.bf16.mxu0 0
    %1355 = vmatpush1.bf16.msra.mxu0 %v1314
    %1356 = vmatprep.subr.bf16.mxu0 0
    %1357 = vmatpush1.bf16.msra.mxu0 %v1315
    %1358 = vmatprep.subr.bf16.mxu0 0
    %1359 = vmatpush1.bf16.msra.mxu0 %v1316
    %1360 = vmatprep.subr.bf16.mxu0 0
    %1361 = vmatpush1.bf16.msra.mxu0 %v1317
    %1362 = vmatprep.subr.bf16.mxu0 0
    %1363 = vmatpush1.bf16.msra.mxu0 %v1318
    %1364 = vmatprep.subr.bf16.mxu0 0
    %1365 = vmatpush1.bf16.msra.mxu0 %v1319
    %1366 = vmatprep.subr.bf16.mxu0 0
    %1367 = vmatpush1.bf16.msra.mxu0 %v1320
    %1368 = vmatprep.subr.bf16.mxu0 0
    %1369 = vmatpush1.bf16.msra.mxu0 %v1321
    %1370 = vmatprep.mubr.bf16.mxu0 %v1202
    %1371 = vmatmul.mubr.bf16.gmra.mrb[0].mxu0 %v1201
    %v1372 = vpop.f32.mrb[0].mxu0
    %v1373 = vadd.f32 %v1240, %v1372
    %v1374 = vpop.f32.mrb[0].mxu0
    %v1375 = vpop.f32.mrb[0].mxu0
    %v1376 = vadd.f32 %v1240, %v1375
    %v1377 = vpop.f32.mrb[0].mxu0
    %1378 = vdwg.mxu0
    %v1379 = vpack.c.bf16 %v1376, %v1373
    %v1381 = vunpack.c.l.b16 %v1379
    %v1382 = vunpack.c.h.b16 %v1379
    %v1383 = vpack.c.b16 %v1381, %v1381
    %v1384 = vpack.c.b16 %v1382, %v1382
    %1387 = vst [vmem:[#allocation5] sm:$0xf] %v1383
    %1388 = vst [vmem:[#allocation5 + $0x4] sm:$0xf] %v1384
    // Predicated region
    $region38: #{tpu_custom_call.1} parent=1 // pred_check
      _
    $region39: #{tpu_custom_call.1} parent=1 // pred_check_branch
      %1390 = sbr.rel (0) target = $region41
    $region40: #{tpu_custom_call.1} parent=1 // pred_region
      %s1392 = ssub.s32 128, 128
      %1393 = vsyncadd [#allocation4], %s1392
      %s1394 = sshll.u32 [#allocation5], 4
      %s1395 = int_to_ptr.vmem [resolvable:$true] %s1394
      %1400 = dma.vmem_to_hbm [thread:$0]  %s1395, 128, %s8, [#allocation4], 64, 64, 4
    $region41: #{tpu_custom_call.1} parent=1 // pred_fallthru
      _
    // Predicated region
    $region42: #{tpu_custom_call.1} parent=1 // pred_check
      _
    $region43: #{tpu_custom_call.1} parent=1 // pred_check_branch
      %1402 = sbr.rel (0) target = $region45
    $region44: #{tpu_custom_call.1} parent=1 // pred_region
      %1403 = dma.done [#allocation4], 128
    $region45: #{tpu_custom_call.1} parent=1 // pred_fallthru
      _
    %1404 = vsyncpa [#allocation3], 1
    %1405 = vsyncpa [#allocation4], 1

</llo_original>
